<compile_context>
chip_gen: v7x
topology: tpu7x:2x2x1
jax: 0.10.0
libtpu: 0.0.40
codegen_flags: <defaults>
</compile_context>

<pallas_src>
import jax
import jax.numpy as jnp
from jax.experimental import pallas as pl
from jax.experimental.pallas import tpu as pltpu


# ----------------------------------------------------------------------------
# Pallas kernel: raw HBM -> HBM DMA identity copy (the empty-Sequential
# forward, materialized).  No grid, no VMEM staging.
# ----------------------------------------------------------------------------
def _dma_identity_kernel(x_hbm, o_hbm, sem):
    cp = pltpu.make_async_copy(x_hbm, o_hbm, sem)
    cp.start()
    cp.wait()


def _pallas_identity_copy(x):
    """Materialized identity: one HBM->HBM async DMA over the whole array."""
    return pl.pallas_call(
        _dma_identity_kernel,
        out_shape=jax.ShapeDtypeStruct(x.shape, x.dtype),
        in_specs=[pl.BlockSpec(memory_space=pl.ANY)],
        out_specs=pl.BlockSpec(memory_space=pl.ANY),
        scratch_shapes=[pltpu.SemaphoreType.DMA(())],
    )(x)


# ----------------------------------------------------------------------------
# Forward pass of Perceptualcriterion.
# ----------------------------------------------------------------------------
def perceptual_criterion_forward(x, *, force_pallas_copy=False):
    """Forward of Perceptualcriterion: empty nn.Sequential == identity.

    Default (production) path short-circuits and returns `x` unchanged —
    zero kernels, zero HBM traffic.  Set `force_pallas_copy=True` to run the
    Pallas HBM->HBM DMA kernel and materialize a fresh output buffer.
    """
    if not force_pallas_copy:
        return x
    return _pallas_identity_copy(x)


# ----------------------------------------------------------------------------
# Deterministic "module" construction mirroring __init__ (unused in forward,
# exactly like the reference module, which only registers these layers).
# ----------------------------------------------------------------------------
def build_perceptual_criterion_params(key, in_channels=4, hidden_channels=8):
    """Registers conv_1 / relu_1 / pool_1 like the reference __init__.

    These parameters are NEVER used in forward() (the reference forward only
    applies the empty discriminator)."""
    k1, k2 = jax.random.split(key)
    params = {
        "conv_1": {
            "weight": jax.random.normal(
                k1, (hidden_channels, in_channels, 3, 3), jnp.float32
            )
            * 0.05,
            "bias": jax.random.normal(k2, (hidden_channels,), jnp.float32) * 0.05,
        },
        # relu_1 / pool_1 have no parameters.
    }
    layers = ["conv_1", "relu_1", "pool_1"]
    return params, layers


if __name__ == "__main__":
    key = jax.random.PRNGKey(0)
    k_in, k_params = jax.random.split(key)

    # Small NCHW input consistent with an image-style module.
    x = jax.random.normal(k_in, (2, 4, 16, 16), jnp.float32)

    # Build (unused) layer params to mirror __init__.
    _params, _layers = build_perceptual_criterion_params(k_params)

    # 1) Production path: pure short-circuit identity (zero cost).
    out_fast = perceptual_criterion_forward(x)
    assert out_fast.shape == x.shape and out_fast.dtype == x.dtype

    # 2) Pallas kernel artifact: raw HBM->HBM DMA identity copy.
    forward_kernel = jax.jit(
        lambda a: perceptual_criterion_forward(a, force_pallas_copy=True)
    )
    out = forward_kernel(x)
    out = jax.block_until_ready(out)

    # Forward is the empty Sequential => identity.
    assert out.shape == x.shape and out.dtype == x.dtype
    assert bool(jnp.allclose(out, x)), "identity forward mismatch"
    assert bool(jnp.allclose(out_fast, x)), "short-circuit forward mismatch"

    print("KERNEL_OK")
</pallas_src>

<mosaic_0001>
module attributes {stable_mosaic.version = 11 : i64} {
  func.func @_dma_identity_kernel(%arg0: memref<2x4x16x16xf32, #tpu.memory_space<any>>, %arg1: memref<2x4x16x16xf32, #tpu.memory_space<any>>, %arg2: memref<!tpu.dma_semaphore, #tpu.memory_space<semaphore_mem>>) attributes {dimension_semantics = [], scalar_prefetch = 0 : i64, scratch_operands = 1 : i64, tpu.core_type = #tpu.core_type<tc>} {
    tpu.enqueue_dma source(%arg0 : memref<2x4x16x16xf32, #tpu.memory_space<any>>) target(%arg1 : memref<2x4x16x16xf32, #tpu.memory_space<any>>) target_semaphore(%arg2 : memref<!tpu.dma_semaphore, #tpu.memory_space<semaphore_mem>>)
    tpu.wait_dma2 semaphore(%arg2 : memref<!tpu.dma_semaphore, #tpu.memory_space<semaphore_mem>>) src(%arg0 : memref<2x4x16x16xf32, #tpu.memory_space<any>>) dst(%arg1 : memref<2x4x16x16xf32, #tpu.memory_space<any>>)
    return
  }
}

</mosaic_0001>

<llo_original>
// kernel: _lambda_.1
$region0: #{_lambda_.1}
  #allocation0 [shape = 'u32[]', space=smem, size = 0x4, offset = 0x4, fixed_abs, tag = 'smem constant byte address 0x4 - core index']
  #allocation1 [shape = 'u32[144,128]{1,0:T(1,128)}', space=vmem, size = 0x12000, scoped, tag = 'internal scratch']
  #allocation2 [shape = 's32[1]{0}', space=sflag, size = 0x4, scoped, tag = 'scratch operand']
  #allocation3 [shape = 's32[]', space=sflag, size = 0x4, offset = 0, fixed_abs, tag = 'sflag constant byte address 0x0 - dummy sync flag']
  #allocation4 [shape = 'u32[0]{0}', space=smem, size = 0, offset = 0, fixed_abs, tag = 'smem constant byte address 0x0 - null']
  %s0 = inlined_call_operand.hbm [shape: f32[2,4,16,16], index: 0, kind: input, shape index: {}]
  %s1 = inlined_call_operand.hbm [shape: f32[2,4,16,16], index: 1, kind: output, shape index: {}]
  %s2 = sld [smem:[#allocation0]]
  $region2: #{_lambda_.1} parent=0
    _
  %s4 = ssub.s32 1, %s2
  %s5 = scalar_select 0, %s4, %s2
  %s7 = sshll.u32 1, 14
  %s8 = sxor.u32 4294967295, %s7
  %s11 = sshll.u32 3, 24
  %s12 = sxor.u32 4294967295, %s11
  %s13 = sand.u32 0, %s12
  %s15 = sor.u32 %s13, 0
  %18 = dma.general %s0, 2048, %s1, [#allocation2], [#allocation3], [#allocation4], %s15, 0
  %s19 = smul.u32 2, 4
  %s20 = smul.u32 %s19, 16
  %s21 = smul.u32 %s20, 1
  %s22 = sshll.u32 %s21, 4
  %23 = dma.done [#allocation2], %s22
  %24 = vsyncmov [#allocation2]
  %s25 = vpop.sfrf %24
  %p26 = scmp.eq.s32.totalorder %s25, 0
  %p27 = pneg %p26
  %29 = shalt.err (%p27)

</llo_original>
